<compile_context>
chip_gen: v6e
topology: v6e:2x2x1
jax: 0.10.0
libtpu: 0.0.40
codegen_flags: <defaults>
</compile_context>

<pallas_src>
import functools
import math

import jax
import jax.numpy as jnp
from jax.experimental import pallas as pl
from jax.experimental.pallas import tpu as pltpu


# ----------------------------------------------------------------------------
# Helpers
# ----------------------------------------------------------------------------
def _vmem_limit_bytes():
    cap = 64 * 1024 * 1024          # safe floor (v7x per-TC VMEM) if query fails
    try:
        info = pltpu.get_tpu_info()
        cap = int(getattr(info, "vmem_capacity_bytes", cap))
    except Exception:
        pass
    return int(cap * 3 // 4)        # ~96 MiB on v5e/v6e (128 MiB), ~48 MiB on v7x (64 MiB)


_VMEM_LIMIT = _vmem_limit_bytes()


def _round_up(x, m):
    return ((x + m - 1) // m) * m


def _choose_tile(dim, pref):
    """Full dim if small, otherwise the preferred tile (caller pads dim to a multiple)."""
    return int(dim) if dim <= pref else int(pref)


def _pad_axis(x, axis, target, value=0.0):
    pad = target - x.shape[axis]
    if pad == 0:
        return x
    widths = [(0, 0)] * x.ndim
    widths[axis] = (0, pad)
    return jnp.pad(x, widths, constant_values=value)


# ----------------------------------------------------------------------------
# Tiled linear:  y = x @ W + b  (optional ReLU), f32 accumulation on the MXU.
# Dims are padded to tile multiples (exact: zero padding of the contraction).
# ----------------------------------------------------------------------------
def _linear_kernel(x_ref, w_ref, b_ref, o_ref, acc_ref, *, relu):
    @pl.when(pl.program_id(2) == 0)
    def _():
        acc_ref[...] = jnp.zeros_like(acc_ref)

    acc_ref[...] += jnp.dot(x_ref[...], w_ref[...],
                            preferred_element_type=jnp.float32)

    @pl.when(pl.program_id(2) == pl.num_programs(2) - 1)
    def _():
        y = acc_ref[...] + b_ref[...].astype(jnp.float32)
        if relu:
            y = jnp.maximum(y, 0.0)
        o_ref[...] = y.astype(o_ref.dtype)


def linear_pallas(x, w, b, *, relu=False, out_dtype=jnp.bfloat16,
                  tm=256, tn=512, tk=512):
    """x: (M, K) bf16, w: (K, N) bf16, b: (N,) f32 -> (M, N)."""
    M, K = x.shape
    N = w.shape[1]
    tm = _choose_tile(M, tm)
    tn = _choose_tile(N, tn)
    tk = _choose_tile(K, tk)
    Mp, Np, Kp = _round_up(M, tm), _round_up(N, tn), _round_up(K, tk)
    xp = _pad_axis(_pad_axis(x, 0, Mp), 1, Kp)
    wp = _pad_axis(_pad_axis(w, 0, Kp), 1, Np)
    bp = _pad_axis(b.reshape(1, N).astype(jnp.float32), 1, Np)
    grid = (Mp // tm, Np // tn, Kp // tk)
    out = pl.pallas_call(
        functools.partial(_linear_kernel, relu=relu),
        out_shape=jax.ShapeDtypeStruct((Mp, Np), out_dtype),
        grid=grid,
        in_specs=[
            pl.BlockSpec((tm, tk), lambda i, j, k: (i, k)),
            pl.BlockSpec((tk, tn), lambda i, j, k: (k, j)),
            pl.BlockSpec((1, tn), lambda i, j, k: (0, j)),
        ],
        out_specs=pl.BlockSpec((tm, tn), lambda i, j, k: (i, j)),
        scratch_shapes=[pltpu.VMEM((tm, tn), jnp.float32)],
        compiler_params=pltpu.CompilerParams(
            dimension_semantics=("parallel", "parallel", "arbitrary"),
            vmem_limit_bytes=_VMEM_LIMIT),
    )(xp, wp, bp)
    if (Mp, Np) != (M, N):
        out = out[:M, :N]
    return out


# ----------------------------------------------------------------------------
# Flash-style multi-head attention.
# q: (B*H, Tq, Dh), k/v: (B*H, Tk, Dh), bias: (Tq, Tk) additive mask (shared).
# grid = (B*H, Tq/tq, Tk/tk); online softmax with f32 m/l/acc scratch; Dh is the
# full lane dim (no sub-128 lane slicing, no concat, no (Tq,Tk) materialization).
# ----------------------------------------------------------------------------
def _flash_mha_kernel(q_ref, k_ref, v_ref, bias_ref, o_ref,
                      m_sc, l_sc, acc_sc, *, scale):
    j = pl.program_id(2)

    @pl.when(j == 0)
    def _():
        m_sc[...] = jnp.full_like(m_sc, -jnp.inf)
        l_sc[...] = jnp.zeros_like(l_sc)
        acc_sc[...] = jnp.zeros_like(acc_sc)

    q = q_ref[0] * scale                           # fold scale into the (tq, Dh) operand
    s = jax.lax.dot_general(q, k_ref[0], (((1,), (1,)), ((), ())),
                            preferred_element_type=jnp.float32)
    s = s + bias_ref[...]
    m_new = jnp.maximum(m_sc[...], jnp.max(s, axis=-1, keepdims=True))
    alpha = jnp.exp(m_sc[...] - m_new)
    p = jnp.exp(s - m_new)
    l_sc[...] = alpha * l_sc[...] + jnp.sum(p, axis=-1, keepdims=True)
    acc_sc[...] = alpha * acc_sc[...] + jnp.dot(p.astype(v_ref.dtype), v_ref[0],
                                                preferred_element_type=jnp.float32)
    m_sc[...] = m_new

    @pl.when(j == pl.num_programs(2) - 1)
    def _():
        o_ref[0] = (acc_sc[...] * pl.reciprocal(l_sc[...], approx=True)).astype(o_ref.dtype)


def flash_mha_pallas(q, k, v, bias, *, scale, tq=256, tkv=256):
    BH, Tq, Dh = q.shape
    Tk = k.shape[1]
    tq = _choose_tile(Tq, tq)
    tkv = _choose_tile(Tk, tkv)
    Tqp, Tkp = _round_up(Tq, tq), _round_up(Tk, tkv)
    qp = _pad_axis(q, 1, Tqp)
    kp = _pad_axis(k, 1, Tkp)
    vp = _pad_axis(v, 1, Tkp)
    # padded key columns get a -1e20 bias so they receive ~0 probability
    biasp = _pad_axis(_pad_axis(bias, 1, Tkp, value=-1e20), 0, Tqp, value=0.0)
    grid = (BH, Tqp // tq, Tkp // tkv)
    out = pl.pallas_call(
        functools.partial(_flash_mha_kernel, scale=scale),
        out_shape=jax.ShapeDtypeStruct((BH, Tqp, Dh), jnp.bfloat16),
        grid=grid,
        in_specs=[
            pl.BlockSpec((1, tq, Dh), lambda b, i, j: (b, i, 0)),
            pl.BlockSpec((1, tkv, Dh), lambda b, i, j: (b, j, 0)),
            pl.BlockSpec((1, tkv, Dh), lambda b, i, j: (b, j, 0)),
            pl.BlockSpec((tq, tkv), lambda b, i, j: (i, j)),
        ],
        out_specs=pl.BlockSpec((1, tq, Dh), lambda b, i, j: (b, i, 0)),
        scratch_shapes=[pltpu.VMEM((tq, 1), jnp.float32),
                        pltpu.VMEM((tq, 1), jnp.float32),
                        pltpu.VMEM((tq, Dh), jnp.float32)],
        compiler_params=pltpu.CompilerParams(
            dimension_semantics=("parallel", "parallel", "arbitrary"),
            vmem_limit_bytes=_VMEM_LIMIT),
    )(qp, kp, vp, biasp)
    if Tqp != Tq:
        out = out[:, :Tq, :]
    return out


# ----------------------------------------------------------------------------
# Fused: output projection + residual add + LayerNorm (LN in f32).
# Contraction (K=E) is tiled so only a (tk, E) weight slice is VMEM-resident.
# ----------------------------------------------------------------------------
def _proj_add_ln_kernel(a_ref, w_ref, b_ref, r_ref, g_ref, be_ref, o_ref, acc_ref, *, eps):
    k = pl.program_id(1)

    @pl.when(k == 0)
    def _():
        acc_ref[...] = jnp.zeros_like(acc_ref)

    acc_ref[...] += jnp.dot(a_ref[...], w_ref[...], preferred_element_type=jnp.float32)

    @pl.when(k == pl.num_programs(1) - 1)
    def _():
        x = acc_ref[...] + b_ref[...].astype(jnp.float32) + r_ref[...].astype(jnp.float32)
        mean = jnp.mean(x, axis=-1, keepdims=True)
        xc = x - mean
        var = jnp.mean(xc * xc, axis=-1, keepdims=True)
        n = xc * jax.lax.rsqrt(var + eps)
        o_ref[...] = (n * g_ref[...] + be_ref[...]).astype(o_ref.dtype)


def proj_add_ln_pallas(a, w, b, residual, gamma, beta, *, eps=1e-5, tm=256, tk=512):
    M, K = a.shape
    N = w.shape[1]                      # N = E is kept whole (LayerNorm needs the full row)
    tm = _choose_tile(M, tm)
    tk = _choose_tile(K, tk)
    Mp, Kp = _round_up(M, tm), _round_up(K, tk)
    ap = _pad_axis(_pad_axis(a, 0, Mp), 1, Kp)
    wp = _pad_axis(w, 0, Kp)
    rp = _pad_axis(residual, 0, Mp)
    grid = (Mp // tm, Kp // tk)
    out = pl.pallas_call(
        functools.partial(_proj_add_ln_kernel, eps=eps),
        out_shape=jax.ShapeDtypeStruct((Mp, N), jnp.bfloat16),
        grid=grid,
        in_specs=[
            pl.BlockSpec((tm, tk), lambda i, k: (i, k)),
            pl.BlockSpec((tk, N), lambda i, k: (k, 0)),
            pl.BlockSpec((1, N), lambda i, k: (0, 0), pipeline_mode=pl.Buffered(1)),
            pl.BlockSpec((tm, N), lambda i, k: (i, 0)),
            pl.BlockSpec((1, N), lambda i, k: (0, 0), pipeline_mode=pl.Buffered(1)),
            pl.BlockSpec((1, N), lambda i, k: (0, 0), pipeline_mode=pl.Buffered(1)),
        ],
        out_specs=pl.BlockSpec((tm, N), lambda i, k: (i, 0)),
        scratch_shapes=[pltpu.VMEM((tm, N), jnp.float32)],
        compiler_params=pltpu.CompilerParams(
            dimension_semantics=("parallel", "arbitrary"),
            vmem_limit_bytes=_VMEM_LIMIT),
    )(ap, wp, b.reshape(1, N), rp, gamma.reshape(1, N), beta.reshape(1, N))
    if Mp != M:
        out = out[:M]
    return out


# ----------------------------------------------------------------------------
# Fused FFN: Linear(E,4E) + ReLU + Linear(4E,E) + residual + LayerNorm.
# The hidden dim H is tiled: only (E,th)+(th,E) weight slices and a (tm,th)
# intermediate are VMEM-resident; the second matmul accumulates over H in f32.
# ----------------------------------------------------------------------------
def _ffn_add_ln_kernel(x_ref, w1_ref, b1_ref, w2_ref, b2_ref, g_ref, be_ref,
                       o_ref, acc_ref, *, eps):
    j = pl.program_id(1)

    @pl.when(j == 0)
    def _():
        acc_ref[...] = jnp.zeros_like(acc_ref)

    x = x_ref[...]
    h = jnp.dot(x, w1_ref[...], preferred_element_type=jnp.float32)
    h = jnp.maximum(h + b1_ref[...].astype(jnp.float32), 0.0)
    acc_ref[...] += jnp.dot(h.astype(x.dtype), w2_ref[...],
                            preferred_element_type=jnp.float32)

    @pl.when(j == pl.num_programs(1) - 1)
    def _():
        z = acc_ref[...] + b2_ref[...].astype(jnp.float32) + x_ref[...].astype(jnp.float32)
        mean = jnp.mean(z, axis=-1, keepdims=True)
        zc = z - mean
        var = jnp.mean(zc * zc, axis=-1, keepdims=True)
        n = zc * jax.lax.rsqrt(var + eps)
        o_ref[...] = (n * g_ref[...] + be_ref[...]).astype(o_ref.dtype)


def ffn_add_ln_pallas(x, w1, b1, w2, b2, gamma, beta, *, eps=1e-5, tm=256, th=None):
    M, E = x.shape
    H = w1.shape[1]
    if th is None:                       # keep (E,th)+(th,E) bf16 slices well under VMEM
        th = 2048 if E <= 1024 else (1024 if E <= 2048 else 512)
    tm = _choose_tile(M, tm)
    th = _choose_tile(H, th)
    Mp, Hp = _round_up(M, tm), _round_up(H, th)
    xp = _pad_axis(x, 0, Mp)
    w1p = _pad_axis(w1, 1, Hp)
    b1p = _pad_axis(b1.reshape(1, H), 1, Hp)
    w2p = _pad_axis(w2, 0, Hp)
    grid = (Mp // tm, Hp // th)
    out = pl.pallas_call(
        functools.partial(_ffn_add_ln_kernel, eps=eps),
        out_shape=jax.ShapeDtypeStruct((Mp, E), jnp.bfloat16),
        grid=grid,
        in_specs=[
            pl.BlockSpec((tm, E), lambda i, j: (i, 0)),
            pl.BlockSpec((E, th), lambda i, j: (0, j)),
            pl.BlockSpec((1, th), lambda i, j: (0, j)),
            pl.BlockSpec((th, E), lambda i, j: (j, 0)),
            pl.BlockSpec((1, E), lambda i, j: (0, 0), pipeline_mode=pl.Buffered(1)),
            pl.BlockSpec((1, E), lambda i, j: (0, 0), pipeline_mode=pl.Buffered(1)),
            pl.BlockSpec((1, E), lambda i, j: (0, 0), pipeline_mode=pl.Buffered(1)),
        ],
        out_specs=pl.BlockSpec((tm, E), lambda i, j: (i, 0)),
        scratch_shapes=[pltpu.VMEM((tm, E), jnp.float32)],
        compiler_params=pltpu.CompilerParams(
            dimension_semantics=("parallel", "arbitrary"),
            vmem_limit_bytes=_VMEM_LIMIT),
    )(xp, w1p, b1p, w2p, b2.reshape(1, E), gamma.reshape(1, E), beta.reshape(1, E))
    if Mp != M:
        out = out[:M]
    return out


# ----------------------------------------------------------------------------
# Model glue (reshapes / parameter plumbing in plain JAX)
# ----------------------------------------------------------------------------
def _split_heads(x, B, T, heads, Dh):
    """(B*T*heads, d) -> (B*heads, T, d) head-major (one XLA transpose)."""
    d = x.shape[-1]
    return x.reshape(B, T, heads, d).transpose(0, 2, 1, 3).reshape(B * heads, T, d)


def attention_block(p, q_src, kv_src, bias, residual, ln_g, ln_b, heads, embed_size):
    """SelfAttention (shared per-head Q/K/V proj, heads folded into M) + out-proj + add + LN."""
    B, Tq, E = q_src.shape
    Tk = kv_src.shape[1]
    Dh = E // heads
    scale = 1.0 / math.sqrt(float(embed_size))   # reference scales by sqrt(embed_size)

    # TODO(synk): per-head q/k/v slices of the fused projection output are XLA slices; a
    # multi-output projection kernel would avoid one HBM round trip of the fused buffer.
    if "w_qkv" in p:  # self-attention: fused Q/K/V projection against the true (Dh, 3Dh) weight
        qkv = linear_pallas(q_src.reshape(B * Tq * heads, Dh), p["w_qkv"],
                            jnp.zeros((3 * Dh,), jnp.float32))
        qkv = _split_heads(qkv, B, Tq, heads, Dh)          # (B*heads, Tq, 3Dh)
        q = qkv[..., :Dh]
        k = qkv[..., Dh:2 * Dh]
        v = qkv[..., 2 * Dh:]
    else:             # cross-attention: Q from decoder, fused K/V from encoder output
        q = linear_pallas(q_src.reshape(B * Tq * heads, Dh), p["w_q"],
                          jnp.zeros((Dh,), jnp.float32))
        q = _split_heads(q, B, Tq, heads, Dh)
        kv = linear_pallas(kv_src.reshape(B * Tk * heads, Dh), p["w_kv"],
                           jnp.zeros((2 * Dh,), jnp.float32))
        kv = _split_heads(kv, B, Tk, heads, Dh)            # (B*heads, Tk, 2Dh)
        k = kv[..., :Dh]
        v = kv[..., Dh:]

    attn = flash_mha_pallas(q, k, v, bias, scale=scale)    # (B*heads, Tq, Dh)
    attn = attn.reshape(B, heads, Tq, Dh).transpose(0, 2, 1, 3).reshape(B * Tq, E)
    out = proj_add_ln_pallas(attn, p["wo"], p["bo"],
                             residual.reshape(B * Tq, E), ln_g, ln_b)
    return out.reshape(B, Tq, E)


def decoder_block(lp, x, enc_out, trg_bias, src_bias, heads, embed_size):
    B, Tq, E = x.shape
    # masked self-attention -> LN(attn + x)
    query = attention_block(lp["sa"], x, x, trg_bias, x,
                            lp["norm_g"], lp["norm_b"], heads, embed_size)
    # cross-attention (K/V from encoder) -> LN(attn + query)
    x1 = attention_block(lp["ca"], query, enc_out, src_bias, query,
                         lp["norm1_g"], lp["norm1_b"], heads, embed_size)
    # fused FFN -> LN(ffn + x1)
    out = ffn_add_ln_pallas(x1.reshape(B * Tq, E), lp["ff_w1"], lp["ff_b1"],
                            lp["ff_w2"], lp["ff_b2"], lp["norm2_g"], lp["norm2_b"])
    return out.reshape(B, Tq, E)


def decoder_forward(params, x_tokens, enc_out, trg_mask, src_mask=None,
                    *, heads, embed_size):
    B, T = x_tokens.shape
    Ts = enc_out.shape[1]
    # nn.Embedding lookup — gather, done in plain JAX glue.
    # TODO(synk): embedding gather has no clean tiled BlockSpec form at this size.
    h = jnp.take(params["word_emb"], x_tokens, axis=0)            # (B, T, E) f32
    # sinusoidal positional encoding (+ dropout, identity in eval mode)
    h = (h + params["pe"][:T][None, :, :]).astype(jnp.bfloat16)
    enc = enc_out.astype(jnp.bfloat16)

    # precompute additive mask biases once (masked -> -1e20, else 0)
    trg_bias = jnp.where(trg_mask == 0, jnp.float32(-1e20), jnp.float32(0.0))
    if src_mask is None:
        src_bias = jnp.zeros((T, Ts), jnp.float32)
    else:
        src_bias = jnp.where(src_mask == 0, jnp.float32(-1e20), jnp.float32(0.0))

    for lp in params["layers"]:
        h = decoder_block(lp, h, enc, trg_bias, src_bias, heads, embed_size)

    V = params["fc_w"].shape[1]
    logits = linear_pallas(h.reshape(B * T, embed_size), params["fc_w"],
                           params["fc_b"], out_dtype=jnp.float32)
    return logits.reshape(B, T, V)


# ----------------------------------------------------------------------------
# Deterministic parameter construction
# ----------------------------------------------------------------------------
def sinusoidal_pe(max_len, d):
    pos = jnp.arange(max_len, dtype=jnp.float32)[:, None]
    div = jnp.exp(jnp.arange(0, d, 2, dtype=jnp.float32) * (-jnp.log(10000.0) / d))
    pe = jnp.zeros((max_len, d), jnp.float32)
    pe = pe.at[:, 0::2].set(jnp.sin(pos * div))
    pe = pe.at[:, 1::2].set(jnp.cos(pos * div))
    return pe


def init_params(key, vocab, embed, heads, layers, fexp, max_len):
    Dh = embed // heads
    keys = iter(jax.random.split(key, 8 + layers * 16))

    def nrm(shape, scale=0.02, dtype=jnp.bfloat16):
        return (scale * jax.random.normal(next(keys), shape, jnp.float32)).astype(dtype)

    params = {
        "word_emb": nrm((vocab, embed), 1.0, jnp.float32),
        "pe": sinusoidal_pe(max_len, embed),
        "fc_w": nrm((embed, vocab)),
        "fc_b": jnp.zeros((vocab,), jnp.float32),
        "layers": [],
    }
    for _ in range(layers):
        layer = {
            "sa": {
                # shared per-head (Dh, Dh) projections, fused along the output dim
                "w_qkv": jnp.concatenate([nrm((Dh, Dh)), nrm((Dh, Dh)), nrm((Dh, Dh))], axis=1),
                "wo": nrm((embed, embed)),
                "bo": jnp.zeros((embed,), jnp.float32),
            },
            "norm_g": jnp.ones((embed,), jnp.float32),
            "norm_b": jnp.zeros((embed,), jnp.float32),
            "ca": {
                "w_q": nrm((Dh, Dh)),
                "w_kv": jnp.concatenate([nrm((Dh, Dh)), nrm((Dh, Dh))], axis=1),
                "wo": nrm((embed, embed)),
                "bo": jnp.zeros((embed,), jnp.float32),
            },
            "norm1_g": jnp.ones((embed,), jnp.float32),
            "norm1_b": jnp.zeros((embed,), jnp.float32),
            "ff_w1": nrm((embed, fexp * embed)),
            "ff_b1": jnp.zeros((fexp * embed,), jnp.float32),
            "ff_w2": nrm((fexp * embed, embed)),
            "ff_b2": jnp.zeros((embed,), jnp.float32),
            "norm2_g": jnp.ones((embed,), jnp.float32),
            "norm2_b": jnp.zeros((embed,), jnp.float32),
        }
        params["layers"].append(layer)
    return params


# ----------------------------------------------------------------------------
if __name__ == "__main__":
    B, T_TRG, T_SRC = 2, 8, 8
    VOCAB, EMBED, HEADS, LAYERS, FEXP, MAX_LEN = 64, 32, 4, 2, 4, 16

    root = jax.random.PRNGKey(0)
    kp, kx, ke = jax.random.split(root, 3)

    params = init_params(kp, VOCAB, EMBED, HEADS, LAYERS, FEXP, MAX_LEN)
    x_tokens = jax.random.randint(kx, (B, T_TRG), 0, VOCAB, dtype=jnp.int32)
    enc_out = jax.random.normal(ke, (B, T_SRC, EMBED), jnp.float32)
    trg_mask = jnp.tril(jnp.ones((T_TRG, T_TRG), jnp.float32))   # causal mask

    out = decoder_forward(params, x_tokens, enc_out, trg_mask, src_mask=None,
                          heads=HEADS, embed_size=EMBED)
    out = jax.block_until_ready(out)

    assert out.shape == (B, T_TRG, VOCAB), out.shape
    assert bool(jnp.isfinite(out).all())
    print("KERNEL_OK")
</pallas_src>

<mosaic_0001>
module attributes {stable_mosaic.version = 11 : i64} {
  func.func @_linear_kernel(%arg0: i32, %arg1: i32, %arg2: i32, %arg3: memref<64x8xbf16, #tpu.memory_space<vmem>>, %arg4: memref<8x24xbf16, #tpu.memory_space<vmem>>, %arg5: memref<1x24xf32, #tpu.memory_space<vmem>>, %arg6: memref<64x24xbf16, #tpu.memory_space<vmem>>, %arg7: memref<64x24xf32, #tpu.memory_space<vmem>>) attributes {dimension_semantics = [#tpu.dimension_semantics<parallel>, #tpu.dimension_semantics<parallel>, #tpu.dimension_semantics<arbitrary>], iteration_bounds = array<i64: 1, 1, 1>, scalar_prefetch = 0 : i64, scratch_operands = 1 : i64, tpu.core_type = #tpu.core_type<tc>, window_params = [{transform_indices = @transform_0, window_bounds = array<i64: 64, 8>}, {transform_indices = @transform_1, window_bounds = array<i64: 8, 24>}, {transform_indices = @transform_2, window_bounds = array<i64: 1, 24>}, {transform_indices = @transform_3, window_bounds = array<i64: 64, 24>}]} {
    %c0_i32 = arith.constant 0 : i32
    %0 = arith.cmpi eq, %arg2, %c0_i32 : i32
    %1 = arith.extui %0 : i1 to i32
    %c0_i32_0 = arith.constant 0 : i32
    %2 = arith.cmpi ne, %1, %c0_i32_0 : i32
    scf.if %2 {
      %cst_10 = arith.constant 0.000000e+00 : f32
      %12 = vector.broadcast %cst_10 : f32 to vector<64x24xf32>
      %c0_11 = arith.constant 0 : index
      %c0_12 = arith.constant 0 : index
      %13 = vector.load %arg7[%c0_11, %c0_12] : memref<64x24xf32, #tpu.memory_space<vmem>>, vector<64x24xf32>
      tpu.vector_store %arg7[%c0_11, %c0_12], %12 {strides = array<i32>} : memref<64x24xf32, #tpu.memory_space<vmem>>, vector<64x24xf32>,
    } else {
    }
    %c0 = arith.constant 0 : index
    %c0_1 = arith.constant 0 : index
    %3 = vector.load %arg7[%c0, %c0_1] : memref<64x24xf32, #tpu.memory_space<vmem>>, vector<64x24xf32>
    %c0_2 = arith.constant 0 : index
    %c0_3 = arith.constant 0 : index
    %4 = vector.load %arg3[%c0_2, %c0_3] : memref<64x8xbf16, #tpu.memory_space<vmem>>, vector<64x8xbf16>
    %c0_4 = arith.constant 0 : index
    %c0_5 = arith.constant 0 : index
    %5 = vector.load %arg4[%c0_4, %c0_5] : memref<8x24xbf16, #tpu.memory_space<vmem>>, vector<8x24xbf16>
    %cst = arith.constant dense<0.000000e+00> : vector<64x24xf32>
    %6 = tpu.matmul %4, %5, %cst {dimension_numbers = #tpu.dot_dimension_numbers<[1], [0], [0], [1], [0, 0, 1, 1], [], []>} : vector<64x8xbf16>, vector<8x24xbf16>, vector<64x24xf32> -> vector<64x24xf32>
    %7 = arith.addf %3, %6 : vector<64x24xf32>
    %c0_6 = arith.constant 0 : index
    %c0_7 = arith.constant 0 : index
    %8 = vector.load %arg7[%c0_6, %c0_7] : memref<64x24xf32, #tpu.memory_space<vmem>>, vector<64x24xf32>
    tpu.vector_store %arg7[%c0_6, %c0_7], %7 {strides = array<i32>} : memref<64x24xf32, #tpu.memory_space<vmem>>, vector<64x24xf32>,
    %c0_i32_8 = arith.constant 0 : i32
    %9 = arith.cmpi eq, %arg2, %c0_i32_8 : i32
    %10 = arith.extui %9 : i1 to i32
    %c0_i32_9 = arith.constant 0 : i32
    %11 = arith.cmpi ne, %10, %c0_i32_9 : i32
    scf.if %11 {
      %c0_10 = arith.constant 0 : index
      %c0_11 = arith.constant 0 : index
      %12 = vector.load %arg7[%c0_10, %c0_11] : memref<64x24xf32, #tpu.memory_space<vmem>>, vector<64x24xf32>
      %c0_12 = arith.constant 0 : index
      %c0_13 = arith.constant 0 : index
      %13 = vector.load %arg5[%c0_12, %c0_13] : memref<1x24xf32, #tpu.memory_space<vmem>>, vector<1x24xf32>
      %14 = vector.broadcast %13 : vector<1x24xf32> to vector<64x24xf32>
      %15 = arith.addf %12, %14 : vector<64x24xf32>
      %16 = arith.truncf %15 : vector<64x24xf32> to vector<64x24xbf16>
      %c0_14 = arith.constant 0 : index
      %c0_15 = arith.constant 0 : index
      %17 = vector.load %arg6[%c0_14, %c0_15] : memref<64x24xbf16, #tpu.memory_space<vmem>>, vector<64x24xbf16>
      tpu.vector_store %arg6[%c0_14, %c0_15], %16 {strides = array<i32>} : memref<64x24xbf16, #tpu.memory_space<vmem>>, vector<64x24xbf16>,
    } else {
    }
    return
  }
  func.func @transform_0(%arg0: i32, %arg1: i32, %arg2: i32) -> (i32, i32) {
    %c0_i32 = arith.constant 0 : i32
    return %arg0, %arg2 : i32, i32
  }
  func.func @transform_1(%arg0: i32, %arg1: i32, %arg2: i32) -> (i32, i32) {
    %c0_i32 = arith.constant 0 : i32
    return %arg2, %arg1 : i32, i32
  }
  func.func @transform_2(%arg0: i32, %arg1: i32, %arg2: i32) -> (i32, i32) {
    %c0_i32 = arith.constant 0 : i32
    %c0_i32_0 = arith.constant 0 : i32
    return %c0_i32, %arg1 : i32, i32
  }
  func.func @transform_3(%arg0: i32, %arg1: i32, %arg2: i32) -> (i32, i32) {
    %c0_i32 = arith.constant 0 : i32
    return %arg0, %arg1 : i32, i32
  }
}

</mosaic_0001>

<llo_original>
// kernel: tpu_custom_call.1
$region0: #{tpu_custom_call.1}
  #allocation0 [shape = 'u32[]', space=smem, size = 0x4, offset = 0x4, fixed_abs, tag = 'smem constant byte address 0x4 - core index']
  #allocation1 [shape = 'u32[144,128]{1,0:T(1,128)}', space=vmem, size = 0x12000, scoped, tag = 'internal scratch']
  #allocation2 [shape = 'f32[64,24]{1,0:T(8,128)}', space=vmem, size = 0x8000, scoped, tag = 'scratch operand']
  %s0 = inlined_call_operand.vmem [shape: bf16[64,8], index: 0, kind: input, shape index: {}]
  %s1 = inlined_call_operand.vmem [shape: bf16[8,24], index: 1, kind: input, shape index: {}]
  %s2 = inlined_call_operand.vmem [shape: f32[1,24], index: 2, kind: input, shape index: {}]
  %s3 = inlined_call_operand.vmem [shape: bf16[64,24], index: 3, kind: output, shape index: {}]
  %s4 = sld [smem:[#allocation0]]
  $region30: #{tpu_custom_call.1} parent=0
    _
  %s6 = ssub.s32 1, %s4
  %s7 = scalar_select 0, %s6, %s4
  // Predicated region
  $region2: #{tpu_custom_call.1} parent=0 // pred_check
    _
  $region3: #{tpu_custom_call.1} parent=0 // pred_check_branch
    %9 = sbr.rel (0) target = $region5
  $region4: #{tpu_custom_call.1} parent=0 // pred_region
    _
  $region5: #{tpu_custom_call.1} parent=0 // pred_fallthru
    _
  // Predicated region
  $region6: #{tpu_custom_call.1} parent=0 // pred_check
    _
  $region7: #{tpu_custom_call.1} parent=0 // pred_check_branch
    %11 = sbr.rel (0) target = $region9
  $region8: #{tpu_custom_call.1} parent=0 // pred_region
    _
  $region9: #{tpu_custom_call.1} parent=0 // pred_fallthru
    _
  // Predicated region
  $region10: #{tpu_custom_call.1} parent=0 // pred_check
    _
  $region11: #{tpu_custom_call.1} parent=0 // pred_check_branch
    %13 = sbr.rel (0) target = $region13
  $region12: #{tpu_custom_call.1} parent=0 // pred_region
    _
  $region13: #{tpu_custom_call.1} parent=0 // pred_fallthru
    _
  %p15 = scmp.eq.s32.totalorder 0, 0
  // Predicated region
  $region14: #{tpu_custom_call.1} parent=0 // pred_check
    %p16 = pneg %p15
  $region15: #{tpu_custom_call.1} parent=0 // pred_check_branch
    %18 = sbr.rel (%p16) target = $region17
  $region16: #{tpu_custom_call.1} parent=0 // pred_region
    %vm19 = vcmask 195584
    %20 = vst.msk [vmem:[#allocation2] sm:$0xff] %vm19, 0.0
    %21 = vst.msk [vmem:[#allocation2 + $0x8] sm:$0xff] %vm19, 0.0
    %22 = vst.msk [vmem:[#allocation2 + $0x10] sm:$0xff] %vm19, 0.0
    %23 = vst.msk [vmem:[#allocation2 + $0x18] sm:$0xff] %vm19, 0.0
    %24 = vst.msk [vmem:[#allocation2 + $0x20] sm:$0xff] %vm19, 0.0
    %25 = vst.msk [vmem:[#allocation2 + $0x28] sm:$0xff] %vm19, 0.0
    %26 = vst.msk [vmem:[#allocation2 + $0x30] sm:$0xff] %vm19, 0.0
    %27 = vst.msk [vmem:[#allocation2 + $0x38] sm:$0xff] %vm19, 0.0
  $region17: #{tpu_custom_call.1} parent=0 // pred_fallthru
    _
  %v28 = vld [vmem:[#allocation2] sm:$0xff]
  %v29 = vld [vmem:[#allocation2 + $0x8] sm:$0xff]
  %v30 = vld [vmem:[#allocation2 + $0x10] sm:$0xff]
  %v31 = vld [vmem:[#allocation2 + $0x18] sm:$0xff]
  %v32 = vld [vmem:[#allocation2 + $0x20] sm:$0xff]
  %v33 = vld [vmem:[#allocation2 + $0x28] sm:$0xff]
  %v34 = vld [vmem:[#allocation2 + $0x30] sm:$0xff]
  %v35 = vld [vmem:[#allocation2 + $0x38] sm:$0xff]
  %v36 = vld [vmem:[%s0] sm:$0xf]
  %v37 = vld [vmem:[%s0 + $0x4] sm:$0xf]
  %v38 = vld [vmem:[%s0 + $0x8] sm:$0xf]
  %v39 = vld [vmem:[%s0 + $0xc] sm:$0xf]
  %v40 = vld [vmem:[%s0 + $0x10] sm:$0xf]
  %v41 = vld [vmem:[%s0 + $0x14] sm:$0xf]
  %v42 = vld [vmem:[%s0 + $0x18] sm:$0xf]
  %v43 = vld [vmem:[%s0 + $0x1c] sm:$0xf]
  %v44 = vld [vmem:[%s1] sm:$0xf]
  %v53 = vunpack.c.l.b16 %v36
  %v54 = vunpack.c.l.b16 %v37
  %v55 = vunpack.c.l.b16 %v38
  %v56 = vunpack.c.l.b16 %v39
  %v57 = vunpack.c.l.b16 %v40
  %v58 = vunpack.c.l.b16 %v41
  %v59 = vunpack.c.l.b16 %v42
  %v60 = vunpack.c.l.b16 %v43
  %v61 = vpack.c.b16 %v54, %v53
  %v62 = vpack.c.b16 %v56, %v55
  %v63 = vpack.c.b16 %v58, %v57
  %v64 = vpack.c.b16 %v60, %v59
  %vm65 = vcmask 64512
  %v67 = vsel %vm65, %v61, 0
  %v70 = vsel %vm65, %v62, 0
  %v73 = vsel %vm65, %v63, 0
  %v76 = vsel %vm65, %v64, 0
  %vm78 = vcmask 1043456
  %v80 = vsel %vm78, %v44, 0
  %82 = vmatprep.subr.bf16.mxu0 0
  %83 = vmatpush1.bf16.msra.mxu0 0
  %84 = vmatprep.subr.bf16.mxu0 0
  %85 = vmatpush1.bf16.msra.mxu0 0
  %86 = vmatprep.subr.bf16.mxu0 0
  %87 = vmatpush1.bf16.msra.mxu0 0
  %88 = vmatprep.subr.bf16.mxu0 0
  %89 = vmatpush1.bf16.msra.mxu0 0
  %90 = vmatprep.subr.bf16.mxu0 0
  %91 = vmatpush1.bf16.msra.mxu0 0
  %92 = vmatprep.subr.bf16.mxu0 0
  %93 = vmatpush1.bf16.msra.mxu0 0
  %94 = vmatprep.subr.bf16.mxu0 0
  %95 = vmatpush1.bf16.msra.mxu0 0
  %96 = vmatprep.subr.bf16.mxu0 0
  %97 = vmatpush1.bf16.msra.mxu0 %v80
  %98 = vmatprep.subr.bf16.mxu0 0
  %99 = vmatpush2.bf16.msra.mxu0 0
  %100 = vmatprep.subr.bf16.mxu0 0
  %101 = vmatpush2.bf16.msra.mxu0 0
  %102 = vmatprep.subr.bf16.mxu0 0
  %103 = vmatpush2.bf16.msra.mxu0 0
  %104 = vmatprep.subr.bf16.mxu0 0
  %105 = vmatpush2.bf16.msra.mxu0 0
  %106 = vmatprep.subr.bf16.mxu0 0
  %107 = vmatpush2.bf16.msra.mxu0 0
  %108 = vmatprep.subr.bf16.mxu0 0
  %109 = vmatpush2.bf16.msra.mxu0 0
  %110 = vmatprep.subr.bf16.mxu0 0
  %111 = vmatpush2.bf16.msra.mxu0 0
  %112 = vmatprep.subr.bf16.mxu0 0
  %113 = vmatpush2.bf16.msra.mxu0 0
  %114 = vmatprep.mubr.bf16.mxu0 0
  %115 = vmatmul.mubr.bf16.gmra.mxu0 %v67
  %v116 = vpop.f32.mrf.mxu0
  %v117 = vadd.f32 0.0, %v116
  %v118 = vpop.f32.mrf.mxu0
  %v119 = vpop.f32.mrf.mxu0
  %v120 = vadd.f32 0.0, %v119
  %v121 = vpop.f32.mrf.mxu0
  %122 = vmatprep.mubr.bf16.mxu0 0
  %123 = vmatmul.mubr.bf16.gmra.mxu0 %v70
  %v124 = vpop.f32.mrf.mxu0
  %v125 = vadd.f32 0.0, %v124
  %v126 = vpop.f32.mrf.mxu0
  %v127 = vpop.f32.mrf.mxu0
  %v128 = vadd.f32 0.0, %v127
  %v129 = vpop.f32.mrf.mxu0
  %130 = vmatprep.mubr.bf16.mxu0 0
  %131 = vmatmul.mubr.bf16.gmra.mxu0 %v73
  %v132 = vpop.f32.mrf.mxu0
  %v133 = vadd.f32 0.0, %v132
  %v134 = vpop.f32.mrf.mxu0
  %v135 = vpop.f32.mrf.mxu0
  %v136 = vadd.f32 0.0, %v135
  %v137 = vpop.f32.mrf.mxu0
  %138 = vmatprep.mubr.bf16.mxu0 0
  %139 = vmatmul.mubr.bf16.gmra.mxu0 %v76
  %v140 = vpop.f32.mrf.mxu0
  %v141 = vadd.f32 0.0, %v140
  %v142 = vpop.f32.mrf.mxu0
  %v143 = vpop.f32.mrf.mxu0
  %v144 = vadd.f32 0.0, %v143
  %v145 = vpop.f32.mrf.mxu0
  %146 = vdwg.mxu0
  %v147 = vadd.f32 %v28, %v117
  %v148 = vadd.f32 %v29, %v120
  %v149 = vadd.f32 %v30, %v125
  %v150 = vadd.f32 %v31, %v128
  %v151 = vadd.f32 %v32, %v133
  %v152 = vadd.f32 %v33, %v136
  %v153 = vadd.f32 %v34, %v141
  %v154 = vadd.f32 %v35, %v144
  %vm155 = vcmask 195584
  %156 = vst.msk [vmem:[#allocation2] sm:$0xff] %vm155, %v147
  %157 = vst.msk [vmem:[#allocation2 + $0x8] sm:$0xff] %vm155, %v148
  %158 = vst.msk [vmem:[#allocation2 + $0x10] sm:$0xff] %vm155, %v149
  %159 = vst.msk [vmem:[#allocation2 + $0x18] sm:$0xff] %vm155, %v150
  %160 = vst.msk [vmem:[#allocation2 + $0x20] sm:$0xff] %vm155, %v151
  %161 = vst.msk [vmem:[#allocation2 + $0x28] sm:$0xff] %vm155, %v152
  %162 = vst.msk [vmem:[#allocation2 + $0x30] sm:$0xff] %vm155, %v153
  %163 = vst.msk [vmem:[#allocation2 + $0x38] sm:$0xff] %vm155, %v154
  // Predicated region
  $region18: #{tpu_custom_call.1} parent=0 // pred_check
    %p164 = pneg %p15
  $region19: #{tpu_custom_call.1} parent=0 // pred_check_branch
    %166 = sbr.rel (%p164) target = $region21
  $region20: #{tpu_custom_call.1} parent=0 // pred_region
    %v167 = vld [vmem:[#allocation2] sm:$0xff]
    %v168 = vld [vmem:[#allocation2 + $0x8] sm:$0xff]
    %v169 = vld [vmem:[#allocation2 + $0x10] sm:$0xff]
    %v170 = vld [vmem:[#allocation2 + $0x18] sm:$0xff]
    %v171 = vld [vmem:[#allocation2 + $0x20] sm:$0xff]
    %v172 = vld [vmem:[#allocation2 + $0x28] sm:$0xff]
    %v173 = vld [vmem:[#allocation2 + $0x30] sm:$0xff]
    %v174 = vld [vmem:[#allocation2 + $0x38] sm:$0xff]
    %v175 = vld [vmem:[%s2] sm:$0x1]
    %v177 = vlaneseq
    %v178 = vshrl.u32 %v177, 7
    %v179 = vsub.s32 0, %v178
    %v180 = vrot.slane %v175, %v179
    %v182 = vadd.f32 %v167, %v180
    %v183 = vadd.f32 %v168, %v180
    %v184 = vadd.f32 %v169, %v180
    %v185 = vadd.f32 %v170, %v180
    %v186 = vadd.f32 %v171, %v180
    %v187 = vadd.f32 %v172, %v180
    %v188 = vadd.f32 %v173, %v180
    %v189 = vadd.f32 %v174, %v180
    %v190 = vpack.c.bf16 %v183, %v182
    %v191 = vpack.c.bf16 %v185, %v184
    %v192 = vpack.c.bf16 %v187, %v186
    %v193 = vpack.c.bf16 %v189, %v188
    %v198 = vunpack.c.l.b16 %v190
    %v199 = vunpack.c.h.b16 %v190
    %v200 = vunpack.c.l.b16 %v191
    %v201 = vunpack.c.h.b16 %v191
    %v202 = vunpack.c.l.b16 %v192
    %v203 = vunpack.c.h.b16 %v192
    %v204 = vunpack.c.l.b16 %v193
    %v205 = vunpack.c.h.b16 %v193
    %v206 = vpack.c.b16 %v198, %v198
    %v207 = vpack.c.b16 %v199, %v199
    %v208 = vpack.c.b16 %v200, %v200
    %v209 = vpack.c.b16 %v201, %v201
    %v210 = vpack.c.b16 %v202, %v202
    %v211 = vpack.c.b16 %v203, %v203
    %v212 = vpack.c.b16 %v204, %v204
    %v213 = vpack.c.b16 %v205, %v205
    %vm222 = vcmask 191488
    %223 = vst.msk [vmem:[%s3] sm:$0xf] %vm222, %v206
    %224 = vst.msk [vmem:[%s3 + $0x4] sm:$0xf] %vm222, %v207
    %225 = vst.msk [vmem:[%s3 + $0x8] sm:$0xf] %vm222, %v208
    %226 = vst.msk [vmem:[%s3 + $0xc] sm:$0xf] %vm222, %v209
    %227 = vst.msk [vmem:[%s3 + $0x10] sm:$0xf] %vm222, %v210
    %228 = vst.msk [vmem:[%s3 + $0x14] sm:$0xf] %vm222, %v211
    %229 = vst.msk [vmem:[%s3 + $0x18] sm:$0xf] %vm222, %v212
    %230 = vst.msk [vmem:[%s3 + $0x1c] sm:$0xf] %vm222, %v213
  $region21: #{tpu_custom_call.1} parent=0 // pred_fallthru
    _
  // Predicated region
  $region22: #{tpu_custom_call.1} parent=0 // pred_check
    _
  $region23: #{tpu_custom_call.1} parent=0 // pred_check_branch
    %232 = sbr.rel (0) target = $region25
  $region24: #{tpu_custom_call.1} parent=0 // pred_region
    _
  $region25: #{tpu_custom_call.1} parent=0 // pred_fallthru
    _
  // Predicated region
  $region26: #{tpu_custom_call.1} parent=0 // pred_check
    _
  $region27: #{tpu_custom_call.1} parent=0 // pred_check_branch
    %234 = sbr.rel (0) target = $region29
  $region28: #{tpu_custom_call.1} parent=0 // pred_region
    _
  $region29: #{tpu_custom_call.1} parent=0 // pred_fallthru
    _

</llo_original>
